<compile_context>
chip_gen: v5e
topology: v5e:2x2
jax: 0.10.0
libtpu: 0.0.40
codegen_flags: <defaults>
</compile_context>

<pallas_src>
import jax
import jax.numpy as jnp
from jax.experimental import pallas as pl
from jax.experimental.pallas import tpu as pltpu


def _round_up(x, m):
    return ((x + m - 1) // m) * m


def _largest_tile(n_pad, cap):
    """Largest multiple of 128 that divides n_pad and is <= cap (at least 128)."""
    best = 128
    t = 256
    limit = min(cap, n_pad)
    while t <= limit:
        if n_pad % t == 0:
            best = t
        t += 128
    return best


def _pick_tiling(n, tm_cap=1024, tk_cap=2048,
                 hbm_bytes_per_s=1.0e12, step_overhead_s=0.35e-6):
    """Decouple row padding from tile size.

    Searches a few paddings (multiples of 128) and picks the one minimizing
    estimated time ~= (int8 A bytes)/BW + grid_steps * 0.35us.  Big tiles
    amortize the fixed per-grid-step overhead; tight padding keeps the
    quadratic A stream small.
    """
    n128 = _round_up(max(n, 1), 128)
    best = None
    for n_pad in range(n128, n128 + 5 * 128, 128):
        tm = _largest_tile(n_pad, tm_cap)
        tk = _largest_tile(n_pad, tk_cap)
        steps = (n_pad // tm) * (n_pad // tk)
        est = (n_pad * n_pad) / hbm_bytes_per_s + steps * step_overhead_s
        if best is None or est < best[0]:
            best = (est, (n_pad, tm, tk))
    return best[1]


def _vmem_limit_bytes(req):
    """Scoped-VMEM cap: generous but gen-aware (v7x has 64 MiB physical)."""
    cap = 96 * 1024 * 1024
    try:
        cap = int(pltpu.get_tpu_info().vmem_capacity_bytes) * 3 // 4
    except Exception:
        pass
    want = max(32 * 1024 * 1024, req + 8 * 1024 * 1024)
    return max(min(want, cap), req + 2 * 1024 * 1024)


# ----------------------------- Pallas kernel -----------------------------
# Grid = (rows, reduction).
#   a_ref:    [TM, TK]  int8   raw 0/1(+multiplicity) adjacency tile
#   xw_ref:   [N_PAD, C_PAD] f32  VMEM-resident D^{-1/2}-scaled features
#   dinv_ref: [TM, 1]   f32   per-output-row D^{-1/2}
#   b_ref:    [1, C_PAD] f32  fused bias
#   out_ref:  [TM, C_PAD] f32 (lane-dense), resident across k -> accumulator.

def _gcn_agg_kernel(a_ref, xw_ref, dinv_ref, b_ref, out_ref):
    k = pl.program_id(1)
    tk = a_ref.shape[1]

    @pl.when(k == 0)
    def _():
        out_ref[...] = jnp.zeros_like(out_ref)

    start = pl.multiple_of(k * tk, 128)
    a = a_ref[...].astype(jnp.float32)          # 0/1 values: exact upcast
    out_ref[...] += jnp.dot(a, xw_ref[pl.ds(start, tk), :],
                            preferred_element_type=jnp.float32)

    @pl.when(k == pl.num_programs(1) - 1)
    def _():
        out_ref[...] = dinv_ref[...] * out_ref[...] + b_ref[...]


# ------------------------------ JAX wrapper ------------------------------

def gcn_normalized_adjacency(edge_index, num_nodes):
    """Dense f32 A_hat = D^{-1/2}(A + I)D^{-1/2} (reference only).

    Matches PyG gcn_norm with add_remaining_self_loops for edge_weight=None and
    no duplicate self-loops (diagonal forced to exactly 1); duplicate non-self
    edges accumulate weight, consistent with PyG's scatter-sum.
    """
    src, dst = edge_index[0], edge_index[1]
    w = jnp.where(src != dst, 1.0, 0.0).astype(jnp.float32)
    a = jnp.zeros((num_nodes, num_nodes), jnp.float32).at[dst, src].add(w)
    a = jnp.where(jnp.eye(num_nodes, dtype=bool), 1.0, a)
    deg = jnp.sum(a, axis=1)
    dinv = jnp.where(deg > 0, jax.lax.rsqrt(deg), 0.0)
    return dinv[:, None] * a * dinv[None, :]


def variational_linear_encoder(x, edge_index, params):
    """Returns (mu, logstd), each [N, C_out]."""
    n, _ = x.shape
    c_out = params["w_mu"].shape[1]
    c2 = 2 * c_out

    # Fused weights / biases: [Cin, 2*Cout], [1, 2*Cout]
    w_cat = jnp.concatenate([params["w_mu"], params["w_logstd"]], axis=1)
    b_cat = jnp.concatenate([params["b_mu"], params["b_logstd"]], axis=1)

    c_pad = _round_up(c2, 128)
    n_pad, tm, tk = _pick_tiling(n)

    # --- 1-byte padded adjacency built directly (single int8 scatter) ---
    src, dst = edge_index[0], edge_index[1]
    w01 = jnp.where(src != dst, 1, 0).astype(jnp.int8)
    a01 = jnp.zeros((n_pad, n_pad), jnp.int8).at[dst, src].add(w01)
    idx = jnp.arange(n)
    a01 = a01.at[idx, idx].set(jnp.ones((n,), jnp.int8))   # one self-loop per node

    # Degrees from edges (O(E), avoids re-reading the N^2 matrix).
    deg = jnp.ones((n_pad,), jnp.float32).at[dst].add(
        jnp.where(src != dst, 1.0, 0.0))
    dinv = jax.lax.rsqrt(deg).reshape(n_pad, 1)             # deg >= 1 everywhere

    # Tiny feature matmul + right-side D^{-1/2} folded in (all f32).
    xw = jnp.dot(x, w_cat)                                   # [n, 2*Cout]
    xw_pad = jnp.zeros((n_pad, c_pad), jnp.float32).at[:n, :c2].set(xw) * dinv
    b_pad = jnp.zeros((1, c_pad), jnp.float32).at[:, :c2].set(b_cat)

    vmem_req = (2 * tm * tk                # A int8, double-buffered
                + n_pad * c_pad * 4        # resident XW (f32)
                + 2 * tm * c_pad * 4       # output block (f32), double-buffered
                + 2 * tm * 4               # dinv
                + 2 * c_pad * 4)           # bias

    cost = pl.CostEstimate(
        flops=2 * n_pad * n_pad * c_pad,
        transcendentals=0,
        bytes_accessed=(n_pad * n_pad                      # A (int8), read once
                        + n_pad * c_pad * 4                # XW, read once
                        + n_pad * c_pad * 4                # output write
                        + n_pad * 4 + c_pad * 4),          # dinv + bias
    )

    out = pl.pallas_call(
        _gcn_agg_kernel,
        out_shape=jax.ShapeDtypeStruct((n_pad, c_pad), jnp.float32),
        grid_spec=pltpu.PrefetchScalarGridSpec(
            num_scalar_prefetch=0,
            grid=(n_pad // tm, n_pad // tk),
            in_specs=[
                pl.BlockSpec((tm, tk), lambda i, k: (i, k)),        # A tile (int8)
                pl.BlockSpec((n_pad, c_pad), lambda i, k: (0, 0)),  # XW resident
                pl.BlockSpec((tm, 1), lambda i, k: (i, 0)),         # row D^{-1/2}
                pl.BlockSpec((1, c_pad), lambda i, k: (0, 0)),      # fused bias
            ],
            out_specs=pl.BlockSpec((tm, c_pad), lambda i, k: (i, 0)),
        ),
        compiler_params=pltpu.CompilerParams(
            dimension_semantics=("parallel", "arbitrary"),
            vmem_limit_bytes=_vmem_limit_bytes(vmem_req),
        ),
        cost_estimate=cost,
    )(a01, xw_pad, dinv, b_pad)

    mu = out[:n, :c_out]
    logstd = out[:n, c_out:c2]
    return mu, logstd


def init_params(key, in_channels, out_channels):
    k1, k2 = jax.random.split(key)
    limit = (6.0 / (in_channels + out_channels)) ** 0.5
    w_mu = jax.random.uniform(k1, (in_channels, out_channels), jnp.float32,
                              -limit, limit)
    w_ls = jax.random.uniform(k2, (in_channels, out_channels), jnp.float32,
                              -limit, limit)
    return {
        "w_mu": w_mu,
        "b_mu": jnp.zeros((1, out_channels), jnp.float32),
        "w_logstd": w_ls,
        "b_logstd": jnp.zeros((1, out_channels), jnp.float32),
    }


# ------------------------------- reference -------------------------------

def _reference(x, edge_index, params):
    a_hat = gcn_normalized_adjacency(edge_index, x.shape[0])
    mu = a_hat @ (x @ params["w_mu"]) + params["b_mu"]
    ls = a_hat @ (x @ params["w_logstd"]) + params["b_logstd"]
    return mu, ls


# TODO(synk): for very large sparse graphs, replace the dense int8 adjacency
# stream with a PrefetchScalarGridSpec neighbor-gather (O(E) traffic, not O(N^2)).

if __name__ == "__main__":
    N, C_IN, C_OUT = 16, 8, 4
    key = jax.random.PRNGKey(0)
    kx, kp = jax.random.split(key)

    # deterministic node features
    x = jax.random.normal(kx, (N, C_IN), dtype=jnp.float32)

    # deterministic undirected ring graph: i <-> (i+1) mod N
    s = jnp.arange(N, dtype=jnp.int32)
    d = (s + 1) % N
    edge_index = jnp.stack(
        [jnp.concatenate([s, d]), jnp.concatenate([d, s])], axis=0
    )  # [2, 2N]

    params = init_params(kp, C_IN, C_OUT)
    mu_ref, ls_ref = _reference(x, edge_index, params)

    enc = jax.jit(variational_linear_encoder)
    mu, ls = enc(x, edge_index, params)
    jax.block_until_ready((mu, ls))

    assert mu.shape == (N, C_OUT) and ls.shape == (N, C_OUT)
    assert jnp.allclose(mu, mu_ref, atol=1e-3, rtol=1e-3), "mu mismatch"
    assert jnp.allclose(ls, ls_ref, atol=1e-3, rtol=1e-3), "logstd mismatch"

    print("KERNEL_OK")
</pallas_src>

<mosaic_0001>
module attributes {stable_mosaic.version = 11 : i64} {
  func.func @_gcn_agg_kernel(%arg0: i32, %arg1: i32, %arg2: memref<128x128xi8, #tpu.memory_space<vmem>>, %arg3: memref<128x128xf32, #tpu.memory_space<vmem>>, %arg4: memref<128x1xf32, #tpu.memory_space<vmem>>, %arg5: memref<1x128xf32, #tpu.memory_space<vmem>>, %arg6: memref<128x128xf32, #tpu.memory_space<vmem>>) attributes {dimension_semantics = [#tpu.dimension_semantics<parallel>, #tpu.dimension_semantics<arbitrary>], iteration_bounds = array<i64: 1, 1>, scalar_prefetch = 0 : i64, scratch_operands = 0 : i64, tpu.core_type = #tpu.core_type<tc>, window_params = [{transform_indices = @transform_0, window_bounds = array<i64: 128, 128>}, {pipeline_mode = #tpu.pipeline_mode<synchronous>, transform_indices = @transform_1, window_bounds = array<i64: 128, 128>}, {transform_indices = @transform_2, window_bounds = array<i64: 128, 1>}, {pipeline_mode = #tpu.pipeline_mode<synchronous>, transform_indices = @transform_3, window_bounds = array<i64: 1, 128>}, {transform_indices = @transform_4, window_bounds = array<i64: 128, 128>}]} {
    %c0_i32 = arith.constant 0 : i32
    %0 = arith.cmpi eq, %arg1, %c0_i32 : i32
    %1 = arith.extui %0 : i1 to i32
    %c0_i32_0 = arith.constant 0 : i32
    %2 = arith.cmpi ne, %1, %c0_i32_0 : i32
    scf.if %2 {
      %cst_9 = arith.constant 0.000000e+00 : f32
      %16 = vector.broadcast %cst_9 : f32 to vector<128x128xf32>
      %c0_10 = arith.constant 0 : index
      %c0_11 = arith.constant 0 : index
      %17 = vector.load %arg6[%c0_10, %c0_11] : memref<128x128xf32, #tpu.memory_space<vmem>>, vector<128x128xf32>
      tpu.vector_store %arg6[%c0_10, %c0_11], %16 {strides = array<i32>} : memref<128x128xf32, #tpu.memory_space<vmem>>, vector<128x128xf32>,
    } else {
    }
    %c128_i32 = arith.constant 128 : i32
    %3 = arith.muli %arg1, %c128_i32 : i32
    %4 = tpu.assume_multiple %3, 128 : i32
    %c0 = arith.constant 0 : index
    %c0_1 = arith.constant 0 : index
    %5 = vector.load %arg2[%c0, %c0_1] : memref<128x128xi8, #tpu.memory_space<vmem>>, vector<128x128xi8>
    %6 = arith.sitofp %5 : vector<128x128xi8> to vector<128x128xf32>
    %c0_2 = arith.constant 0 : index
    %c0_3 = arith.constant 0 : index
    %7 = vector.load %arg6[%c0_2, %c0_3] : memref<128x128xf32, #tpu.memory_space<vmem>>, vector<128x128xf32>
    %8 = arith.index_cast %4 : i32 to index
    %c0_4 = arith.constant 0 : index
    %9 = vector.load %arg3[%8, %c0_4] : memref<128x128xf32, #tpu.memory_space<vmem>>, vector<128x128xf32>
    %cst = arith.constant dense<0.000000e+00> : vector<128x128xf32>
    %10 = tpu.matmul %6, %9, %cst {dimension_numbers = #tpu.dot_dimension_numbers<[1], [0], [0], [1], [0, 0, 1, 1], [], []>} : vector<128x128xf32>, vector<128x128xf32>, vector<128x128xf32> -> vector<128x128xf32>
    %11 = arith.addf %7, %10 : vector<128x128xf32>
    %c0_5 = arith.constant 0 : index
    %c0_6 = arith.constant 0 : index
    %12 = vector.load %arg6[%c0_5, %c0_6] : memref<128x128xf32, #tpu.memory_space<vmem>>, vector<128x128xf32>
    tpu.vector_store %arg6[%c0_5, %c0_6], %11 {strides = array<i32>} : memref<128x128xf32, #tpu.memory_space<vmem>>, vector<128x128xf32>,
    %c0_i32_7 = arith.constant 0 : i32
    %13 = arith.cmpi eq, %arg1, %c0_i32_7 : i32
    %14 = arith.extui %13 : i1 to i32
    %c0_i32_8 = arith.constant 0 : i32
    %15 = arith.cmpi ne, %14, %c0_i32_8 : i32
    scf.if %15 {
      %c0_9 = arith.constant 0 : index
      %c0_10 = arith.constant 0 : index
      %16 = vector.load %arg4[%c0_9, %c0_10] : memref<128x1xf32, #tpu.memory_space<vmem>>, vector<128x1xf32>
      %c0_11 = arith.constant 0 : index
      %c0_12 = arith.constant 0 : index
      %17 = vector.load %arg6[%c0_11, %c0_12] : memref<128x128xf32, #tpu.memory_space<vmem>>, vector<128x128xf32>
      %18 = vector.broadcast %16 : vector<128x1xf32> to vector<128x128xf32>
      %19 = arith.mulf %18, %17 : vector<128x128xf32>
      %c0_13 = arith.constant 0 : index
      %c0_14 = arith.constant 0 : index
      %20 = vector.load %arg5[%c0_13, %c0_14] : memref<1x128xf32, #tpu.memory_space<vmem>>, vector<1x128xf32>
      %21 = vector.broadcast %20 : vector<1x128xf32> to vector<128x128xf32>
      %22 = arith.addf %19, %21 : vector<128x128xf32>
      %c0_15 = arith.constant 0 : index
      %c0_16 = arith.constant 0 : index
      %23 = vector.load %arg6[%c0_15, %c0_16] : memref<128x128xf32, #tpu.memory_space<vmem>>, vector<128x128xf32>
      tpu.vector_store %arg6[%c0_15, %c0_16], %22 {strides = array<i32>} : memref<128x128xf32, #tpu.memory_space<vmem>>, vector<128x128xf32>,
    } else {
    }
    return
  }
  func.func @transform_0(%arg0: i32, %arg1: i32) -> (i32, i32) {
    %c0_i32 = arith.constant 0 : i32
    return %arg0, %arg1 : i32, i32
  }
  func.func @transform_1(%arg0: i32, %arg1: i32) -> (i32, i32) {
    %c0_i32 = arith.constant 0 : i32
    %c0_i32_0 = arith.constant 0 : i32
    %c0_i32_1 = arith.constant 0 : i32
    return %c0_i32, %c0_i32_0 : i32, i32
  }
  func.func @transform_2(%arg0: i32, %arg1: i32) -> (i32, i32) {
    %c0_i32 = arith.constant 0 : i32
    %c0_i32_0 = arith.constant 0 : i32
    return %arg0, %c0_i32 : i32, i32
  }
  func.func @transform_3(%arg0: i32, %arg1: i32) -> (i32, i32) {
    %c0_i32 = arith.constant 0 : i32
    %c0_i32_0 = arith.constant 0 : i32
    %c0_i32_1 = arith.constant 0 : i32
    return %c0_i32, %c0_i32_0 : i32, i32
  }
  func.func @transform_4(%arg0: i32, %arg1: i32) -> (i32, i32) {
    %c0_i32 = arith.constant 0 : i32
    %c0_i32_0 = arith.constant 0 : i32
    return %arg0, %c0_i32 : i32, i32
  }
}

</mosaic_0001>

<llo_original>
// kernel: variational_linear_encoder.1
$region0: #{variational_linear_encoder.1}
  #allocation0 [shape = 'u32[]', space=smem, size = 0x4, offset = 0x4, fixed_abs, tag = 'smem constant byte address 0x4 - core index']
  #allocation1 [shape = 'u32[72,128]{1,0:T(1,128)}', space=vmem, size = 0x9000, scoped, tag = 'internal scratch']
  %s0 = inlined_call_operand.vmem [shape: s8[128,128], index: 0, kind: input, shape index: {}]
  %s1 = inlined_call_operand.vmem [shape: f32[128,128], index: 1, kind: input, shape index: {}]
  %s2 = inlined_call_operand.vmem [shape: f32[128,1], index: 2, kind: input, shape index: {}]
  %s3 = inlined_call_operand.vmem [shape: f32[1,128], index: 3, kind: input, shape index: {}]
  %s4 = inlined_call_operand.vmem [shape: f32[128,128], index: 4, kind: output, shape index: {}]
  %s5 = sld [smem:[#allocation0]]
  $region34: #{variational_linear_encoder.1} parent=0
    _
  %s7 = ssub.s32 1, %s5
  %s8 = scalar_select 0, %s7, %s5
  // Predicated region
  $region2: #{variational_linear_encoder.1} parent=0 // pred_check
    _
  $region3: #{variational_linear_encoder.1} parent=0 // pred_check_branch
    %10 = sbr.rel (0) target = $region5
  $region4: #{variational_linear_encoder.1} parent=0 // pred_region
    _
  $region5: #{variational_linear_encoder.1} parent=0 // pred_fallthru
    _
  // Predicated region
  $region6: #{variational_linear_encoder.1} parent=0 // pred_check
    _
  $region7: #{variational_linear_encoder.1} parent=0 // pred_check_branch
    %12 = sbr.rel (0) target = $region9
  $region8: #{variational_linear_encoder.1} parent=0 // pred_region
    _
  $region9: #{variational_linear_encoder.1} parent=0 // pred_fallthru
    _
  // Predicated region
  $region10: #{variational_linear_encoder.1} parent=0 // pred_check
    _
  $region11: #{variational_linear_encoder.1} parent=0 // pred_check_branch
    %14 = sbr.rel (0) target = $region13
  $region12: #{variational_linear_encoder.1} parent=0 // pred_region
    _
  $region13: #{variational_linear_encoder.1} parent=0 // pred_fallthru
    _
  // Predicated region
  $region14: #{variational_linear_encoder.1} parent=0 // pred_check
    _
  $region15: #{variational_linear_encoder.1} parent=0 // pred_check_branch
    %16 = sbr.rel (0) target = $region17
  $region16: #{variational_linear_encoder.1} parent=0 // pred_region
    _
  $region17: #{variational_linear_encoder.1} parent=0 // pred_fallthru
    _
  %p17 = scmp.eq.s32.totalorder 0, 0
  // Predicated region
  $region18: #{variational_linear_encoder.1} parent=0 // pred_check
    %p18 = pneg %p17
  $region19: #{variational_linear_encoder.1} parent=0 // pred_check_branch
    %20 = sbr.rel (%p18) target = $region21
  $region20: #{variational_linear_encoder.1} parent=0 // pred_region
    %21 = vst [vmem:[%s4] sm:$0xff] 0.0
    %22 = vst [vmem:[%s4 + $0x8] sm:$0xff] 0.0
    %23 = vst [vmem:[%s4 + $0x10] sm:$0xff] 0.0
    %24 = vst [vmem:[%s4 + $0x18] sm:$0xff] 0.0
    %25 = vst [vmem:[%s4 + $0x20] sm:$0xff] 0.0
    %26 = vst [vmem:[%s4 + $0x28] sm:$0xff] 0.0
    %27 = vst [vmem:[%s4 + $0x30] sm:$0xff] 0.0
    %28 = vst [vmem:[%s4 + $0x38] sm:$0xff] 0.0
    %29 = vst [vmem:[%s4 + $0x40] sm:$0xff] 0.0
    %30 = vst [vmem:[%s4 + $0x48] sm:$0xff] 0.0
    %31 = vst [vmem:[%s4 + $0x50] sm:$0xff] 0.0
    %32 = vst [vmem:[%s4 + $0x58] sm:$0xff] 0.0
    %33 = vst [vmem:[%s4 + $0x60] sm:$0xff] 0.0
    %34 = vst [vmem:[%s4 + $0x68] sm:$0xff] 0.0
    %35 = vst [vmem:[%s4 + $0x70] sm:$0xff] 0.0
    %36 = vst [vmem:[%s4 + $0x78] sm:$0xff] 0.0
  $region21: #{variational_linear_encoder.1} parent=0 // pred_fallthru
    _
  %s37 = smul.u32 0, 128
  %v38 = vld [vmem:[%s0] sm:$0x3]
  %v39 = vld [vmem:[%s0 + $0x2] sm:$0x3]
  %v40 = vld [vmem:[%s0 + $0x4] sm:$0x3]
  %v41 = vld [vmem:[%s0 + $0x6] sm:$0x3]
  %v42 = vld [vmem:[%s0 + $0x8] sm:$0x3]
  %v43 = vld [vmem:[%s0 + $0xa] sm:$0x3]
  %v44 = vld [vmem:[%s0 + $0xc] sm:$0x3]
  %v45 = vld [vmem:[%s0 + $0xe] sm:$0x3]
  %v46 = vld [vmem:[%s0 + $0x10] sm:$0x3]
  %v47 = vld [vmem:[%s0 + $0x12] sm:$0x3]
  %v48 = vld [vmem:[%s0 + $0x14] sm:$0x3]
  %v49 = vld [vmem:[%s0 + $0x16] sm:$0x3]
  %v50 = vld [vmem:[%s0 + $0x18] sm:$0x3]
  %v51 = vld [vmem:[%s0 + $0x1a] sm:$0x3]
  %v52 = vld [vmem:[%s0 + $0x1c] sm:$0x3]
  %v53 = vld [vmem:[%s0 + $0x1e] sm:$0x3]
  %v54 = vunpack.c.0.s8 %v38
  %v55 = vunpack.c.0.s8 %v39
  %v56 = vunpack.c.0.s8 %v40
  %v57 = vunpack.c.0.s8 %v41
  %v58 = vunpack.c.0.s8 %v42
  %v59 = vunpack.c.0.s8 %v43
  %v60 = vunpack.c.0.s8 %v44
  %v61 = vunpack.c.0.s8 %v45
  %v62 = vunpack.c.0.s8 %v46
  %v63 = vunpack.c.0.s8 %v47
  %v64 = vunpack.c.0.s8 %v48
  %v65 = vunpack.c.0.s8 %v49
  %v66 = vunpack.c.0.s8 %v50
  %v67 = vunpack.c.0.s8 %v51
  %v68 = vunpack.c.0.s8 %v52
  %v69 = vunpack.c.0.s8 %v53
  %v70 = vcvt.s32.f32 %v54
  %v71 = vcvt.s32.f32 %v55
  %v72 = vcvt.s32.f32 %v56
  %v73 = vcvt.s32.f32 %v57
  %v74 = vcvt.s32.f32 %v58
  %v75 = vcvt.s32.f32 %v59
  %v76 = vcvt.s32.f32 %v60
  %v77 = vcvt.s32.f32 %v61
  %v78 = vcvt.s32.f32 %v62
  %v79 = vcvt.s32.f32 %v63
  %v80 = vcvt.s32.f32 %v64
  %v81 = vcvt.s32.f32 %v65
  %v82 = vcvt.s32.f32 %v66
  %v83 = vcvt.s32.f32 %v67
  %v84 = vcvt.s32.f32 %v68
  %v85 = vcvt.s32.f32 %v69
  %v86 = vld [vmem:[%s4] sm:$0xff]
  %v87 = vld [vmem:[%s4 + $0x8] sm:$0xff]
  %v88 = vld [vmem:[%s4 + $0x10] sm:$0xff]
  %v89 = vld [vmem:[%s4 + $0x18] sm:$0xff]
  %v90 = vld [vmem:[%s4 + $0x20] sm:$0xff]
  %v91 = vld [vmem:[%s4 + $0x28] sm:$0xff]
  %v92 = vld [vmem:[%s4 + $0x30] sm:$0xff]
  %v93 = vld [vmem:[%s4 + $0x38] sm:$0xff]
  %v94 = vld [vmem:[%s4 + $0x40] sm:$0xff]
  %v95 = vld [vmem:[%s4 + $0x48] sm:$0xff]
  %v96 = vld [vmem:[%s4 + $0x50] sm:$0xff]
  %v97 = vld [vmem:[%s4 + $0x58] sm:$0xff]
  %v98 = vld [vmem:[%s4 + $0x60] sm:$0xff]
  %v99 = vld [vmem:[%s4 + $0x68] sm:$0xff]
  %v100 = vld [vmem:[%s4 + $0x70] sm:$0xff]
  %v101 = vld [vmem:[%s4 + $0x78] sm:$0xff]
  %s102 = scalar_lea.vmem %s1, %s37
  %v103 = vld [vmem:[%s102] sm:$0xff]
  %v104 = vld [vmem:[%s102 + $0x8] sm:$0xff]
  %v105 = vld [vmem:[%s102 + $0x10] sm:$0xff]
  %v106 = vld [vmem:[%s102 + $0x18] sm:$0xff]
  %v107 = vld [vmem:[%s102 + $0x20] sm:$0xff]
  %v108 = vld [vmem:[%s102 + $0x28] sm:$0xff]
  %v109 = vld [vmem:[%s102 + $0x30] sm:$0xff]
  %v110 = vld [vmem:[%s102 + $0x38] sm:$0xff]
  %v111 = vld [vmem:[%s102 + $0x40] sm:$0xff]
  %v112 = vld [vmem:[%s102 + $0x48] sm:$0xff]
  %v113 = vld [vmem:[%s102 + $0x50] sm:$0xff]
  %v114 = vld [vmem:[%s102 + $0x58] sm:$0xff]
  %v115 = vld [vmem:[%s102 + $0x60] sm:$0xff]
  %v116 = vld [vmem:[%s102 + $0x68] sm:$0xff]
  %v117 = vld [vmem:[%s102 + $0x70] sm:$0xff]
  %v118 = vld [vmem:[%s102 + $0x78] sm:$0xff]
  %119 = vmatpush.msra.mxu0 %v118
  %120 = vmatpush.msra.mxu0 %v117
  %121 = vmatpush.msra.mxu0 %v116
  %122 = vmatpush.msra.mxu0 %v115
  %123 = vmatpush.msra.mxu0 %v114
  %124 = vmatpush.msra.mxu0 %v113
  %125 = vmatpush.msra.mxu0 %v112
  %126 = vmatpush.msra.mxu0 %v111
  %127 = vmatpush.msra.mxu0 %v110
  %128 = vmatpush.msra.mxu0 %v109
  %129 = vmatpush.msra.mxu0 %v108
  %130 = vmatpush.msra.mxu0 %v107
  %131 = vmatpush.msra.mxu0 %v106
  %132 = vmatpush.msra.mxu0 %v105
  %133 = vmatpush.msra.mxu0 %v104
  %134 = vmatpush.msra.mxu0 %v103
  %135 = vmatmul.f32.gmra.mxu0 %v70
  %v136 = vpop.f32.mrf.mxu0
  %v137 = vadd.f32 0.0, %v136
  %138 = vmatmul.f32.gmra.mxu0 %v71
  %v139 = vpop.f32.mrf.mxu0
  %v140 = vadd.f32 0.0, %v139
  %141 = vmatmul.f32.gmra.mxu0 %v72
  %v142 = vpop.f32.mrf.mxu0
  %v143 = vadd.f32 0.0, %v142
  %144 = vmatmul.f32.gmra.mxu0 %v73
  %v145 = vpop.f32.mrf.mxu0
  %v146 = vadd.f32 0.0, %v145
  %147 = vmatmul.f32.gmra.mxu0 %v74
  %v148 = vpop.f32.mrf.mxu0
  %v149 = vadd.f32 0.0, %v148
  %150 = vmatmul.f32.gmra.mxu0 %v75
  %v151 = vpop.f32.mrf.mxu0
  %v152 = vadd.f32 0.0, %v151
  %153 = vmatmul.f32.gmra.mxu0 %v76
  %v154 = vpop.f32.mrf.mxu0
  %v155 = vadd.f32 0.0, %v154
  %156 = vmatmul.f32.gmra.mxu0 %v77
  %v157 = vpop.f32.mrf.mxu0
  %v158 = vadd.f32 0.0, %v157
  %159 = vmatmul.f32.gmra.mxu0 %v78
  %v160 = vpop.f32.mrf.mxu0
  %v161 = vadd.f32 0.0, %v160
  %162 = vmatmul.f32.gmra.mxu0 %v79
  %v163 = vpop.f32.mrf.mxu0
  %v164 = vadd.f32 0.0, %v163
  %165 = vmatmul.f32.gmra.mxu0 %v80
  %v166 = vpop.f32.mrf.mxu0
  %v167 = vadd.f32 0.0, %v166
  %168 = vmatmul.f32.gmra.mxu0 %v81
  %v169 = vpop.f32.mrf.mxu0
  %v170 = vadd.f32 0.0, %v169
  %171 = vmatmul.f32.gmra.mxu0 %v82
  %v172 = vpop.f32.mrf.mxu0
  %v173 = vadd.f32 0.0, %v172
  %174 = vmatmul.f32.gmra.mxu0 %v83
  %v175 = vpop.f32.mrf.mxu0
  %v176 = vadd.f32 0.0, %v175
  %177 = vmatmul.f32.gmra.mxu0 %v84
  %v178 = vpop.f32.mrf.mxu0
  %v179 = vadd.f32 0.0, %v178
  %180 = vmatmul.f32.gmra.mxu0 %v85
  %v181 = vpop.f32.mrf.mxu0
  %v182 = vadd.f32 0.0, %v181
  %183 = vdwg.mxu0
  %v184 = vadd.f32 %v86, %v137
  %v185 = vadd.f32 %v87, %v140
  %v186 = vadd.f32 %v88, %v143
  %v187 = vadd.f32 %v89, %v146
  %v188 = vadd.f32 %v90, %v149
  %v189 = vadd.f32 %v91, %v152
  %v190 = vadd.f32 %v92, %v155
  %v191 = vadd.f32 %v93, %v158
  %v192 = vadd.f32 %v94, %v161
  %v193 = vadd.f32 %v95, %v164
  %v194 = vadd.f32 %v96, %v167
  %v195 = vadd.f32 %v97, %v170
  %v196 = vadd.f32 %v98, %v173
  %v197 = vadd.f32 %v99, %v176
  %v198 = vadd.f32 %v100, %v179
  %v199 = vadd.f32 %v101, %v182
  %200 = vst [vmem:[%s4] sm:$0xff] %v184
  %201 = vst [vmem:[%s4 + $0x8] sm:$0xff] %v185
  %202 = vst [vmem:[%s4 + $0x10] sm:$0xff] %v186
  %203 = vst [vmem:[%s4 + $0x18] sm:$0xff] %v187
  %204 = vst [vmem:[%s4 + $0x20] sm:$0xff] %v188
  %205 = vst [vmem:[%s4 + $0x28] sm:$0xff] %v189
  %206 = vst [vmem:[%s4 + $0x30] sm:$0xff] %v190
  %207 = vst [vmem:[%s4 + $0x38] sm:$0xff] %v191
  %208 = vst [vmem:[%s4 + $0x40] sm:$0xff] %v192
  %209 = vst [vmem:[%s4 + $0x48] sm:$0xff] %v193
  %210 = vst [vmem:[%s4 + $0x50] sm:$0xff] %v194
  %211 = vst [vmem:[%s4 + $0x58] sm:$0xff] %v195
  %212 = vst [vmem:[%s4 + $0x60] sm:$0xff] %v196
  %213 = vst [vmem:[%s4 + $0x68] sm:$0xff] %v197
  %214 = vst [vmem:[%s4 + $0x70] sm:$0xff] %v198
  %215 = vst [vmem:[%s4 + $0x78] sm:$0xff] %v199
  // Predicated region
  $region22: #{variational_linear_encoder.1} parent=0 // pred_check
    %p216 = pneg %p17
  $region23: #{variational_linear_encoder.1} parent=0 // pred_check_branch
    %218 = sbr.rel (%p216) target = $region25
  $region24: #{variational_linear_encoder.1} parent=0 // pred_region
    %v219 = vld [vmem:[%s2] sm:$0xff]
    %v220 = vld [vmem:[%s2 + $0x8] sm:$0xff]
    %v221 = vld [vmem:[%s2 + $0x10] sm:$0xff]
    %v222 = vld [vmem:[%s2 + $0x18] sm:$0xff]
    %v223 = vld [vmem:[%s2 + $0x20] sm:$0xff]
    %v224 = vld [vmem:[%s2 + $0x28] sm:$0xff]
    %v225 = vld [vmem:[%s2 + $0x30] sm:$0xff]
    %v226 = vld [vmem:[%s2 + $0x38] sm:$0xff]
    %v227 = vld [vmem:[%s2 + $0x40] sm:$0xff]
    %v228 = vld [vmem:[%s2 + $0x48] sm:$0xff]
    %v229 = vld [vmem:[%s2 + $0x50] sm:$0xff]
    %v230 = vld [vmem:[%s2 + $0x58] sm:$0xff]
    %v231 = vld [vmem:[%s2 + $0x60] sm:$0xff]
    %v232 = vld [vmem:[%s2 + $0x68] sm:$0xff]
    %v233 = vld [vmem:[%s2 + $0x70] sm:$0xff]
    %v234 = vld [vmem:[%s2 + $0x78] sm:$0xff]
    %v235 = vld [vmem:[%s4] sm:$0xff]
    %v236 = vld [vmem:[%s4 + $0x8] sm:$0xff]
    %v237 = vld [vmem:[%s4 + $0x10] sm:$0xff]
    %v238 = vld [vmem:[%s4 + $0x18] sm:$0xff]
    %v239 = vld [vmem:[%s4 + $0x20] sm:$0xff]
    %v240 = vld [vmem:[%s4 + $0x28] sm:$0xff]
    %v241 = vld [vmem:[%s4 + $0x30] sm:$0xff]
    %v242 = vld [vmem:[%s4 + $0x38] sm:$0xff]
    %v243 = vld [vmem:[%s4 + $0x40] sm:$0xff]
    %v244 = vld [vmem:[%s4 + $0x48] sm:$0xff]
    %v245 = vld [vmem:[%s4 + $0x50] sm:$0xff]
    %v246 = vld [vmem:[%s4 + $0x58] sm:$0xff]
    %v247 = vld [vmem:[%s4 + $0x60] sm:$0xff]
    %v248 = vld [vmem:[%s4 + $0x68] sm:$0xff]
    %v249 = vld [vmem:[%s4 + $0x70] sm:$0xff]
    %v250 = vld [vmem:[%s4 + $0x78] sm:$0xff]
    %252 = vset.pattern.permute.xlu0 0
    %253 = vperm.xlu0 %252, %v219
    %v254 = vpop.permute.xlu0 %253
    %257 = vset.pattern.permute.xlu0 0
    %258 = vperm.xlu0 %257, %v220
    %v259 = vpop.permute.xlu0 %258
    %262 = vset.pattern.permute.xlu0 0
    %263 = vperm.xlu0 %262, %v221
    %v264 = vpop.permute.xlu0 %263
    %267 = vset.pattern.permute.xlu0 0
    %268 = vperm.xlu0 %267, %v222
    %v269 = vpop.permute.xlu0 %268
    %272 = vset.pattern.permute.xlu0 0
    %273 = vperm.xlu0 %272, %v223
    %v274 = vpop.permute.xlu0 %273
    %277 = vset.pattern.permute.xlu0 0
    %278 = vperm.xlu0 %277, %v224
    %v279 = vpop.permute.xlu0 %278
    %282 = vset.pattern.permute.xlu0 0
    %283 = vperm.xlu0 %282, %v225
    %v284 = vpop.permute.xlu0 %283
    %287 = vset.pattern.permute.xlu0 0
    %288 = vperm.xlu0 %287, %v226
    %v289 = vpop.permute.xlu0 %288
    %292 = vset.pattern.permute.xlu0 0
    %293 = vperm.xlu0 %292, %v227
    %v294 = vpop.permute.xlu0 %293
    %297 = vset.pattern.permute.xlu0 0
    %298 = vperm.xlu0 %297, %v228
    %v299 = vpop.permute.xlu0 %298
    %302 = vset.pattern.permute.xlu0 0
    %303 = vperm.xlu0 %302, %v229
    %v304 = vpop.permute.xlu0 %303
    %307 = vset.pattern.permute.xlu0 0
    %308 = vperm.xlu0 %307, %v230
    %v309 = vpop.permute.xlu0 %308
    %312 = vset.pattern.permute.xlu0 0
    %313 = vperm.xlu0 %312, %v231
    %v314 = vpop.permute.xlu0 %313
    %317 = vset.pattern.permute.xlu0 0
    %318 = vperm.xlu0 %317, %v232
    %v319 = vpop.permute.xlu0 %318
    %322 = vset.pattern.permute.xlu0 0
    %323 = vperm.xlu0 %322, %v233
    %v324 = vpop.permute.xlu0 %323
    %327 = vset.pattern.permute.xlu0 0
    %328 = vperm.xlu0 %327, %v234
    %v329 = vpop.permute.xlu0 %328
    %v331 = vmul.f32 %v254, %v235
    %v332 = vmul.f32 %v259, %v236
    %v333 = vmul.f32 %v264, %v237
    %v334 = vmul.f32 %v269, %v238
    %v335 = vmul.f32 %v274, %v239
    %v336 = vmul.f32 %v279, %v240
    %v337 = vmul.f32 %v284, %v241
    %v338 = vmul.f32 %v289, %v242
    %v339 = vmul.f32 %v294, %v243
    %v340 = vmul.f32 %v299, %v244
    %v341 = vmul.f32 %v304, %v245
    %v342 = vmul.f32 %v309, %v246
    %v343 = vmul.f32 %v314, %v247
    %v344 = vmul.f32 %v319, %v248
    %v345 = vmul.f32 %v324, %v249
    %v346 = vmul.f32 %v329, %v250
    %v347 = vld [vmem:[%s3] sm:$0x1]
    %v349 = vperm.slane %v347, 0
    %v351 = vadd.f32 %v331, %v349
    %v352 = vadd.f32 %v332, %v349
    %v353 = vadd.f32 %v333, %v349
    %v354 = vadd.f32 %v334, %v349
    %v355 = vadd.f32 %v335, %v349
    %v356 = vadd.f32 %v336, %v349
    %v357 = vadd.f32 %v337, %v349
    %v358 = vadd.f32 %v338, %v349
    %v359 = vadd.f32 %v339, %v349
    %v360 = vadd.f32 %v340, %v349
    %v361 = vadd.f32 %v341, %v349
    %v362 = vadd.f32 %v342, %v349
    %v363 = vadd.f32 %v343, %v349
    %v364 = vadd.f32 %v344, %v349
    %v365 = vadd.f32 %v345, %v349
    %v366 = vadd.f32 %v346, %v349
    %367 = vst [vmem:[%s4] sm:$0xff] %v351
    %368 = vst [vmem:[%s4 + $0x8] sm:$0xff] %v352
    %369 = vst [vmem:[%s4 + $0x10] sm:$0xff] %v353
    %370 = vst [vmem:[%s4 + $0x18] sm:$0xff] %v354
    %371 = vst [vmem:[%s4 + $0x20] sm:$0xff] %v355
    %372 = vst [vmem:[%s4 + $0x28] sm:$0xff] %v356
    %373 = vst [vmem:[%s4 + $0x30] sm:$0xff] %v357
    %374 = vst [vmem:[%s4 + $0x38] sm:$0xff] %v358
    %375 = vst [vmem:[%s4 + $0x40] sm:$0xff] %v359
    %376 = vst [vmem:[%s4 + $0x48] sm:$0xff] %v360
    %377 = vst [vmem:[%s4 + $0x50] sm:$0xff] %v361
    %378 = vst [vmem:[%s4 + $0x58] sm:$0xff] %v362
    %379 = vst [vmem:[%s4 + $0x60] sm:$0xff] %v363
    %380 = vst [vmem:[%s4 + $0x68] sm:$0xff] %v364
    %381 = vst [vmem:[%s4 + $0x70] sm:$0xff] %v365
    %382 = vst [vmem:[%s4 + $0x78] sm:$0xff] %v366
  $region25: #{variational_linear_encoder.1} parent=0 // pred_fallthru
    _
  // Predicated region
  $region26: #{variational_linear_encoder.1} parent=0 // pred_check
    _
  $region27: #{variational_linear_encoder.1} parent=0 // pred_check_branch
    %384 = sbr.rel (0) target = $region29
  $region28: #{variational_linear_encoder.1} parent=0 // pred_region
    _
  $region29: #{variational_linear_encoder.1} parent=0 // pred_fallthru
    _
  // Predicated region
  $region30: #{variational_linear_encoder.1} parent=0 // pred_check
    _
  $region31: #{variational_linear_encoder.1} parent=0 // pred_check_branch
    %386 = sbr.rel (0) target = $region33
  $region32: #{variational_linear_encoder.1} parent=0 // pred_region
    _
  $region33: #{variational_linear_encoder.1} parent=0 // pred_fallthru
    _

</llo_original>
